<compile_context>
chip_gen: v6e
topology: v6e:2x2x1
jax: 0.10.0
libtpu: 0.0.40
codegen_flags: <defaults>
</compile_context>

<pallas_src>
import jax
import jax.numpy as jnp
from jax.experimental import pallas as pl
from jax.experimental.pallas import tpu as pltpu

_LANE = 128


def _fused_kernel(w_ref, b_ref, x_ref, o_ref):
    """Fused linear(F=2) -> relu6 -> min over features, pure VPU.

    w_ref: SMEM (4,)  = [w00, w01, w10, w11]   (PyTorch weight, row-major)
    b_ref: SMEM (2,)  = [b0, b1]
    x_ref: VMEM (2, TILE_M)  row j = feature j of the flattened activations
    o_ref: VMEM (1, TILE_M)  min_j relu6(x @ W^T + b)[:, j]
    """
    x = x_ref[...]                 # (2, TILE_M) f32
    x0 = x[0:1, :]                 # (1, TILE_M)
    x1 = x[1:2, :]                 # (1, TILE_M)

    w00 = w_ref[0]
    w01 = w_ref[1]
    w10 = w_ref[2]
    w11 = w_ref[3]
    b0 = b_ref[0]
    b1 = b_ref[1]

    y0 = jnp.clip(x0 * w00 + x1 * w01 + b0, 0.0, 6.0)
    y1 = jnp.clip(x0 * w10 + x1 * w11 + b1, 0.0, 6.0)
    o_ref[...] = jnp.minimum(y0, y1)


def model_forward(x, weight, bias, *, tile_m=8192):
    """x: (B, C, S, 2); weight: (2, 2); bias: (2,). Returns (B, C, S) f32."""
    B, C, S, F = x.shape
    assert F == 2 and weight.shape == (2, 2) and bias.shape == (2,)
    M = B * C * S

    # Lane-dense tiling over M (pad to a multiple of the tile).
    m_pad = ((M + _LANE - 1) // _LANE) * _LANE
    tile = min(tile_m, m_pad)
    Mp = ((M + tile - 1) // tile) * tile
    grid = (Mp // tile,)

    # (B,C,S,2) -> (2, Mp): feature axis on sublanes, M on lanes (layout plumbing).
    x2 = x.reshape(M, F).astype(jnp.float32).T
    if Mp != M:
        x2 = jnp.pad(x2, ((0, 0), (0, Mp - M)))

    w_flat = weight.astype(jnp.float32).reshape(4)   # [w00, w01, w10, w11]
    b_flat = bias.astype(jnp.float32).reshape(2)

    out = pl.pallas_call(
        _fused_kernel,
        out_shape=jax.ShapeDtypeStruct((1, Mp), jnp.float32),
        grid=grid,
        in_specs=[
            pl.BlockSpec(memory_space=pltpu.MemorySpace.SMEM),   # weight scalars
            pl.BlockSpec(memory_space=pltpu.MemorySpace.SMEM),   # bias scalars
            pl.BlockSpec((2, tile), lambda i: (0, i)),           # activations
        ],
        out_specs=pl.BlockSpec((1, tile), lambda i: (0, i)),
        compiler_params=pltpu.CompilerParams(
            dimension_semantics=("parallel",),
        ),
        cost_estimate=pl.CostEstimate(
            flops=6 * M,
            transcendentals=0,
            bytes_accessed=2 * M * 4 + M * 4,
        ),
    )(w_flat, b_flat, x2)

    return out[0, :M].reshape(B, C, S)


def reference_forward(x, weight, bias):
    v1 = jnp.einsum("bcsf,of->bcso", x, weight) + bias
    v2 = jnp.clip(v1, 0.0, 6.0)
    v3 = jnp.transpose(v2, (0, 1, 3, 2))
    return jnp.min(v3, axis=2)


if __name__ == "__main__":
    key = jax.random.PRNGKey(0)
    kx, kw, kb = jax.random.split(key, 3)

    # Small 4-D input consistent with Linear(2, 2): feature axis = 2 (last).
    B, C, S, F = 2, 4, 48, 2          # M = 384
    x = jax.random.normal(kx, (B, C, S, F), dtype=jnp.float32)

    # PyTorch Linear default init: U(-1/sqrt(F), 1/sqrt(F)).
    bound = 1.0 / jnp.sqrt(jnp.float32(F))
    weight = jax.random.uniform(kw, (F, F), jnp.float32, -bound, bound)
    bias = jax.random.uniform(kb, (F,), jnp.float32, -bound, bound)

    # tile_m=256 -> Mp=512, grid=(2,): exercises multi-tile pipeline + padding.
    out = model_forward(x, weight, bias, tile_m=256)
    out = jax.block_until_ready(out)

    ref = reference_forward(x, weight, bias)
    assert out.shape == (B, C, S)
    assert jnp.allclose(out, ref, atol=1e-5, rtol=1e-5), "mismatch vs reference"

    print("KERNEL_OK")
</pallas_src>

<mosaic_0001>
module attributes {stable_mosaic.version = 11 : i64} {
  func.func @_fused_kernel(%arg0: i32, %arg1: memref<4xf32, #tpu.memory_space<smem>>, %arg2: memref<2xf32, #tpu.memory_space<smem>>, %arg3: memref<2x256xf32, #tpu.memory_space<vmem>>, %arg4: memref<1x256xf32, #tpu.memory_space<vmem>>) attributes {dimension_semantics = [#tpu.dimension_semantics<parallel>], iteration_bounds = array<i64: 2>, scalar_prefetch = 0 : i64, scratch_operands = 0 : i64, tpu.core_type = #tpu.core_type<tc>, window_params = [{transform_indices = @transform_0, window_bounds = array<i64: 4>}, {transform_indices = @transform_1, window_bounds = array<i64: 2>}, {transform_indices = @transform_2, window_bounds = array<i64: 2, 256>}, {transform_indices = @transform_3, window_bounds = array<i64: 1, 256>}]} {
    %c0 = arith.constant 0 : index
    %c0_0 = arith.constant 0 : index
    %0 = vector.load %arg3[%c0, %c0_0] : memref<2x256xf32, #tpu.memory_space<vmem>>, vector<2x256xf32>
    %1 = vector.extract_strided_slice %0 {offsets = [0, 0], sizes = [1, 256], strides = [1, 1]} : vector<2x256xf32> to vector<1x256xf32>
    %2 = vector.extract_strided_slice %0 {offsets = [1, 0], sizes = [1, 256], strides = [1, 1]} : vector<2x256xf32> to vector<1x256xf32>
    %c0_1 = arith.constant 0 : index
    %3 = memref.load %arg1[%c0_1] : memref<4xf32, #tpu.memory_space<smem>>
    %c1 = arith.constant 1 : index
    %4 = memref.load %arg1[%c1] : memref<4xf32, #tpu.memory_space<smem>>
    %c2 = arith.constant 2 : index
    %5 = memref.load %arg1[%c2] : memref<4xf32, #tpu.memory_space<smem>>
    %c3 = arith.constant 3 : index
    %6 = memref.load %arg1[%c3] : memref<4xf32, #tpu.memory_space<smem>>
    %c0_2 = arith.constant 0 : index
    %7 = memref.load %arg2[%c0_2] : memref<2xf32, #tpu.memory_space<smem>>
    %c1_3 = arith.constant 1 : index
    %8 = memref.load %arg2[%c1_3] : memref<2xf32, #tpu.memory_space<smem>>
    %9 = vector.broadcast %3 : f32 to vector<1x256xf32>
    %10 = arith.mulf %1, %9 : vector<1x256xf32>
    %11 = vector.broadcast %4 : f32 to vector<1x256xf32>
    %12 = arith.mulf %2, %11 : vector<1x256xf32>
    %13 = arith.addf %10, %12 : vector<1x256xf32>
    %14 = vector.broadcast %7 : f32 to vector<1x256xf32>
    %15 = arith.addf %13, %14 : vector<1x256xf32>
    %cst = arith.constant 0.000000e+00 : f32
    %cst_4 = arith.constant 6.000000e+00 : f32
    %16 = vector.broadcast %cst : f32 to vector<1x256xf32>
    %17 = arith.maximumf %16, %15 : vector<1x256xf32>
    %18 = vector.broadcast %cst_4 : f32 to vector<1x256xf32>
    %19 = arith.minimumf %18, %17 : vector<1x256xf32>
    %20 = vector.broadcast %5 : f32 to vector<1x256xf32>
    %21 = arith.mulf %1, %20 : vector<1x256xf32>
    %22 = vector.broadcast %6 : f32 to vector<1x256xf32>
    %23 = arith.mulf %2, %22 : vector<1x256xf32>
    %24 = arith.addf %21, %23 : vector<1x256xf32>
    %25 = vector.broadcast %8 : f32 to vector<1x256xf32>
    %26 = arith.addf %24, %25 : vector<1x256xf32>
    %cst_5 = arith.constant 0.000000e+00 : f32
    %cst_6 = arith.constant 6.000000e+00 : f32
    %27 = vector.broadcast %cst_5 : f32 to vector<1x256xf32>
    %28 = arith.maximumf %27, %26 : vector<1x256xf32>
    %29 = vector.broadcast %cst_6 : f32 to vector<1x256xf32>
    %30 = arith.minimumf %29, %28 : vector<1x256xf32>
    %31 = arith.minimumf %19, %30 : vector<1x256xf32>
    %c0_7 = arith.constant 0 : index
    %c0_8 = arith.constant 0 : index
    %32 = vector.load %arg4[%c0_7, %c0_8] : memref<1x256xf32, #tpu.memory_space<vmem>>, vector<1x256xf32>
    tpu.vector_store %arg4[%c0_7, %c0_8], %31 {strides = array<i32>} : memref<1x256xf32, #tpu.memory_space<vmem>>, vector<1x256xf32>,
    return
  }
  func.func @transform_0(%arg0: i32) -> i32 {
    %c0_i32 = arith.constant 0 : i32
    %c0_i32_0 = arith.constant 0 : i32
    return %c0_i32 : i32
  }
  func.func @transform_1(%arg0: i32) -> i32 {
    %c0_i32 = arith.constant 0 : i32
    %c0_i32_0 = arith.constant 0 : i32
    return %c0_i32 : i32
  }
  func.func @transform_2(%arg0: i32) -> (i32, i32) {
    %c0_i32 = arith.constant 0 : i32
    %c0_i32_0 = arith.constant 0 : i32
    return %c0_i32, %arg0 : i32, i32
  }
  func.func @transform_3(%arg0: i32) -> (i32, i32) {
    %c0_i32 = arith.constant 0 : i32
    %c0_i32_0 = arith.constant 0 : i32
    return %c0_i32, %arg0 : i32, i32
  }
}

</mosaic_0001>

<llo_original>
// kernel: tpu_custom_call.1
$region0: #{tpu_custom_call.1}
  #allocation0 [shape = 'u32[]', space=smem, size = 0x4, offset = 0x4, fixed_abs, tag = 'smem constant byte address 0x4 - core index']
  #allocation1 [shape = 'u32[144,128]{1,0:T(1,128)}', space=vmem, size = 0x12000, scoped, tag = 'internal scratch']
  %s0 = inlined_call_operand.hbm [shape: f32[4], index: 0, kind: input, shape index: {}]
  %s1 = inlined_call_operand.vmem [shape: f32[2], index: 1, kind: input, shape index: {}]
  %s2 = inlined_call_operand.hbm [shape: f32[2,512], index: 2, kind: input, shape index: {}]
  %s3 = inlined_call_operand.hbm [shape: f32[1,512], index: 3, kind: output, shape index: {}]
  %s4 = sld [smem:[#allocation0]]
  $region57: #{tpu_custom_call.1} parent=0
    _
  %s6 = ssub.s32 1, %s4
  %s7 = scalar_select 0, %s6, %s4
  $region1: #{tpu_custom_call.1} parent=0
    #allocation2 [shape = 'u8[512]{0}', space=smem, size = 0x200, scoped, tag = 'input window, operand 0, single buffered']
    #allocation3 [shape = 's32[2]{0}', space=sflag, size = 0x8, scoped, tag = 'scoped memory for tpu_custom_call.1']
    #allocation4 [shape = 's32[2]{0}', space=sflag, size = 0x8, scoped, tag = 'scoped memory for tpu_custom_call.1']
    #allocation5 [shape = 's32[2]{0}', space=sflag, size = 0x8, scoped, tag = 'scoped memory for tpu_custom_call.1']
    #allocation6 [shape = 's32[2]{0}', space=sflag, size = 0x8, scoped, tag = 'scoped memory for tpu_custom_call.1']
    #allocation7 [shape = 'u8[512]{0}', space=smem, size = 0x200, scoped, tag = 'input window, operand 1, single buffered']
    #allocation8 [shape = 'u8[4096]{0}', space=vmem, size = 0x1000, scoped, tag = 'input window, operand 2']
    #allocation9 [shape = 'u8[2048]{0}', space=vmem, size = 0x800, scoped, tag = 'output window, operand 0']
    %8 = vsyncpa [#allocation5], 0
    %9 = vsyncpa [#allocation6], 0
    %10 = vsyncpa [#allocation3], 0
    %s11 = scalar_lea.sflag [#allocation3], 1
    %12 = vsyncpa %s11, 0
    %13 = vsyncpa [#allocation4], 0
    %s14 = scalar_lea.sflag [#allocation4], 1
    %15 = vsyncpa %s14, 0
    loop: start=0, step=1, limit=4
    $region2: #{tpu_custom_call.1} parent=1 // loop_pre_header
      _
    $region3: #{tpu_custom_call.1} parent=1 // loop_header
      %s17 = sphi 0, %s21
      %p18 = scmp.ge.s32.totalorder %s17, 4
      %s25 = sphi 0, %s25
      %s27 = sphi 0, %s25
      %s28 = sphi 0, %s27
      %s42 = sphi 0, %s28
      %s46 = sphi 0, %s46
      %s48 = sphi 0, %s46
      %s49 = sphi 0, %s48
      %s63 = sphi 0, %s49
      %s69 = sphi 0, %s71
      %s72 = sphi 0, %s69
      %s73 = sphi 0, %s72
      %s89 = sphi 0, %s73
      %s95 = sphi 0, %s97
      %s98 = sphi 0, %s95
      %s99 = sphi 0, %s98
      %s115 = sphi 0, %s99
    $region4: #{tpu_custom_call.1} parent=1 // loop_header_branch
      %20 = sbr.rel (%p18) target = $region8
    $region5: #{tpu_custom_call.1} parent=1 // loop_body
      %s22 = ssub.s32 %s17, 1
      %s23 = ssub.s32 %s17, 2
      %s24 = sadd.s32 %s17, 1
      %s26 = sadd.s32 %s25, 1
      %p29 = scmp.eq.s32.totalorder %s17, 1
      %p30 = scmp.ne.s32.totalorder %s25, %s27
      %p31 = scmp.eq.s32.totalorder %s17, 0
      %p32 = por %p30, %p31
      %p33 = scmp.ne.s32.totalorder %s25, %s27
      %p34 = scmp.eq.s32.totalorder %s22, 1
      %p35 = por %p33, %p34
      %p36 = scmp.ne.s32.totalorder %s27, %s28
      %p37 = scmp.eq.s32.totalorder %s22, 0
      %p38 = por %p36, %p37
      %p39 = scmp.ne.s32.totalorder %s27, %s28
      %p40 = scmp.eq.s32.totalorder %s23, 1
      %p41 = por %p39, %p40
      %p43 = scmp.ne.s32.totalorder %s28, %s42
      %p44 = scmp.eq.s32.totalorder %s23, 0
      %p45 = por %p43, %p44
      %s47 = sadd.s32 %s46, 1
      %p50 = scmp.eq.s32.totalorder %s17, 1
      %p51 = scmp.ne.s32.totalorder %s46, %s48
      %p52 = scmp.eq.s32.totalorder %s17, 0
      %p53 = por %p51, %p52
      %p54 = scmp.ne.s32.totalorder %s46, %s48
      %p55 = scmp.eq.s32.totalorder %s22, 1
      %p56 = por %p54, %p55
      %p57 = scmp.ne.s32.totalorder %s48, %s49
      %p58 = scmp.eq.s32.totalorder %s22, 0
      %p59 = por %p57, %p58
      %p60 = scmp.ne.s32.totalorder %s48, %s49
      %p61 = scmp.eq.s32.totalorder %s23, 1
      %p62 = por %p60, %p61
      %p64 = scmp.ne.s32.totalorder %s49, %s63
      %p65 = scmp.eq.s32.totalorder %s23, 0
      %p66 = por %p64, %p65
      %s67 = ssub.s32 %s17, %s24
      %p68 = scmp.eq.s32.totalorder %s67, 0
      %s70 = sadd.s32 %s69, 1
      %s71 = scalar_select %p68, %s69, %s70
      %p74 = pneg %p68
      %p75 = scmp.eq.s32.totalorder %s17, 1
      %p76 = por %p74, %p75
      %p77 = scmp.ne.s32.totalorder %s69, %s72
      %p78 = scmp.eq.s32.totalorder %s17, 0
      %p79 = por %p77, %p78
      %p80 = scmp.ne.s32.totalorder %s69, %s72
      %p81 = scmp.eq.s32.totalorder %s22, 1
      %p82 = por %p80, %p81
      %p83 = scmp.ne.s32.totalorder %s72, %s73
      %p84 = scmp.eq.s32.totalorder %s22, 0
      %p85 = por %p83, %p84
      %p86 = scmp.ne.s32.totalorder %s72, %s73
      %p87 = scmp.eq.s32.totalorder %s23, 1
      %p88 = por %p86, %p87
      %p90 = scmp.ne.s32.totalorder %s73, %s89
      %p91 = scmp.eq.s32.totalorder %s23, 0
      %p92 = por %p90, %p91
      %s93 = ssub.s32 %s17, %s24
      %p94 = scmp.eq.s32.totalorder %s93, 0
      %s96 = sadd.s32 %s95, 1
      %s97 = scalar_select %p94, %s95, %s96
      %p100 = pneg %p94
      %p101 = scmp.eq.s32.totalorder %s17, 1
      %p102 = por %p100, %p101
      %p103 = scmp.ne.s32.totalorder %s95, %s98
      %p104 = scmp.eq.s32.totalorder %s17, 0
      %p105 = por %p103, %p104
      %p106 = scmp.ne.s32.totalorder %s95, %s98
      %p107 = scmp.eq.s32.totalorder %s22, 1
      %p108 = por %p106, %p107
      %p109 = scmp.ne.s32.totalorder %s98, %s99
      %p110 = scmp.eq.s32.totalorder %s22, 0
      %p111 = por %p109, %p110
      %p112 = scmp.ne.s32.totalorder %s98, %s99
      %p113 = scmp.eq.s32.totalorder %s23, 1
      %p114 = por %p112, %p113
      %p116 = scmp.ne.s32.totalorder %s99, %s115
      %p117 = scmp.eq.s32.totalorder %s23, 0
      %p118 = por %p116, %p117
      %p119 = scmp.le.s32.totalorder 1, %s17
      %p120 = scmp.lt.s32.totalorder %s17, 3
      %p121 = pnand %p119, %p120
      %p122 = pneg %p121
      // Predicated region
      $region9: #{tpu_custom_call.1} parent=5 // pred_check
        _
      $region10: #{tpu_custom_call.1} parent=5 // pred_check_branch
        %124 = sbr.rel (%p121) target = $region12
      $region11: #{tpu_custom_call.1} parent=5 // pred_region
        %s125 = ssub.s32 %s17, 1
        // Predicated region
        $region13: #{tpu_custom_call.1} parent=11 // pred_check
          %p126 = pneg %p38
        $region14: #{tpu_custom_call.1} parent=11 // pred_check_branch
          %128 = sbr.rel (%p126) target = $region16
        $region15: #{tpu_custom_call.1} parent=11 // pred_region
          %s130 = ssub.s32 16, 16
          %131 = vsyncadd [#allocation5], %s130
          %134 = dma.hbm_to_smem %s0, 16, [#allocation2], [#allocation5]
        $region16: #{tpu_custom_call.1} parent=11 // pred_fallthru
          _
        // Predicated region
        $region17: #{tpu_custom_call.1} parent=11 // pred_check
          %p135 = pneg %p59
        $region18: #{tpu_custom_call.1} parent=11 // pred_check_branch
          %137 = sbr.rel (%p135) target = $region20
        $region19: #{tpu_custom_call.1} parent=11 // pred_region
          %s139 = ssub.s32 16, 16
          %140 = vsyncadd [#allocation6], %s139
          %s142 = sshll.u32 %s1, 4
          %s143 = int_to_ptr.vmem [resolvable:$true] %s142
          %145 = dma.vmem_to_smem %s143, 16, [#allocation7], [#allocation6]
        $region20: #{tpu_custom_call.1} parent=11 // pred_fallthru
          _
      $region12: #{tpu_custom_call.1} parent=5 // pred_fallthru
        _
      %p146 = scmp.lt.s32.totalorder %s17, 2
      // Predicated region
      $region21: #{tpu_custom_call.1} parent=5 // pred_check
        %p147 = pneg %p146
      $region22: #{tpu_custom_call.1} parent=5 // pred_check_branch
        %149 = sbr.rel (%p147) target = $region24
      $region23: #{tpu_custom_call.1} parent=5 // pred_region
        // Predicated region
        $region25: #{tpu_custom_call.1} parent=23 // pred_check
          %p150 = pneg %p79
        $region26: #{tpu_custom_call.1} parent=23 // pred_check_branch
          %152 = sbr.rel (%p150) target = $region28
        $region27: #{tpu_custom_call.1} parent=23 // pred_region
          %s153 = sand.u32 %s69, 1
          %s154 = scalar_lea.sflag [#allocation3], %s153
          %s155 = sand.u32 %s69, 1
          %s156 = smul.addr %s155, 4
          %s157 = scalar_lea.vmem [#allocation8], %s156
          %s158 = smul.u32 2, %s17
          %s160 = ssub.s32 64, 64
          %161 = vsyncadd %s154, %s160
          %s162 = smul.addr %s158, 32
          %s163 = scalar_lea.hbm %s2, %s162
          %s165 = sshll.u32 %s157, 4
          %s166 = int_to_ptr.vmem [resolvable:$true] %s165
          %168 = dma.hbm_to_vmem [thread:$0]  %s163, 64, %s166, %s154
        $region28: #{tpu_custom_call.1} parent=23 // pred_fallthru
          _
      $region24: #{tpu_custom_call.1} parent=5 // pred_fallthru
        _
      %p169 = scmp.le.s32.totalorder 1, %s17
      %p170 = scmp.lt.s32.totalorder %s17, 3
      %p171 = pnand %p169, %p170
      %p172 = pneg %p171
      // Predicated region
      $region29: #{tpu_custom_call.1} parent=5 // pred_check
        _
      $region30: #{tpu_custom_call.1} parent=5 // pred_check_branch
        %174 = sbr.rel (%p171) target = $region32
      $region31: #{tpu_custom_call.1} parent=5 // pred_region
        %s175 = ssub.s32 %s17, 1
        // Predicated region
        $region33: #{tpu_custom_call.1} parent=31 // pred_check
          %p176 = pneg %p38
        $region34: #{tpu_custom_call.1} parent=31 // pred_check_branch
          %178 = sbr.rel (%p176) target = $region36
        $region35: #{tpu_custom_call.1} parent=31 // pred_region
          %179 = dma.done [#allocation5], 16
        $region36: #{tpu_custom_call.1} parent=31 // pred_fallthru
          _
        // Predicated region
        $region37: #{tpu_custom_call.1} parent=31 // pred_check
          %p180 = pneg %p59
        $region38: #{tpu_custom_call.1} parent=31 // pred_check_branch
          %182 = sbr.rel (%p180) target = $region40
        $region39: #{tpu_custom_call.1} parent=31 // pred_region
          %183 = dma.done [#allocation6], 16
        $region40: #{tpu_custom_call.1} parent=31 // pred_fallthru
          _
        %s184 = sand.u32 %s72, 1
        %s185 = scalar_lea.sflag [#allocation3], %s184
        %s186 = sand.u32 %s72, 1
        %s187 = smul.addr %s186, 4
        %s188 = scalar_lea.vmem [#allocation8], %s187
        // Predicated region
        $region41: #{tpu_custom_call.1} parent=31 // pred_check
          %p189 = pneg %p85
        $region42: #{tpu_custom_call.1} parent=31 // pred_check_branch
          %191 = sbr.rel (%p189) target = $region44
        $region43: #{tpu_custom_call.1} parent=31 // pred_region
          %192 = dma.done %s185, 64
        $region44: #{tpu_custom_call.1} parent=31 // pred_fallthru
          _
        %193 = sfence
        %p194 = pneg %p38
        %p195 = pneg %p35
        %p196 = pneg %p59
        %p197 = pneg %p56
        %s198 = sand.u32 %s72, 1
        %s199 = scalar_lea.sflag [#allocation3], %s198
        %s200 = sand.u32 %s72, 1
        %s201 = smul.addr %s200, 4
        %s202 = scalar_lea.vmem [#allocation8], %s201
        %p203 = pneg %p85
        %p204 = pneg %p82
        %p205 = pneg %p111
        %p206 = pneg %p108
        %s207 = sand.u32 %s98, 1
        %s208 = scalar_lea.sflag [#allocation4], %s207
        %s209 = sand.u32 %s98, 1
        %s210 = smul.addr %s209, 2
        %s211 = scalar_lea.vmem [#allocation9], %s210
        %s212 = smul.u32 2, %s22
        %s213 = smul.u32 2, %s22
        %v214 = vld [vmem:[%s188] sm:$0xf]
        %s215 = sld [smem:[#allocation2]]
        %s216 = sld [smem:[#allocation2 + $0x1]]
        %s217 = sld [smem:[#allocation2 + $0x2]]
        %s218 = sld [smem:[#allocation2 + $0x3]]
        %s219 = sld [smem:[#allocation7]]
        %s220 = sld [smem:[#allocation7 + $0x1]]
        %v221 = vstv %s215
        %v222 = vmul.f32 %v214, %v221
        %v223 = vstv %s216
        %v224 = vmul.f32 %v214, %v223
        %v226 = vrot.slane %v224, 7
        %v227 = vrot.slane %v226, 2
        %v229 = vadd.f32 %v222, %v227
        %v230 = vstv %s219
        %v231 = vadd.f32 %v229, %v230
        %v232 = vmax.f32 %v231, 0.0
        %v233 = vmin.f32 %v232, 6.0
        %v234 = vstv %s217
        %v235 = vmul.f32 %v214, %v234
        %v236 = vstv %s218
        %v237 = vmul.f32 %v214, %v236
        %v239 = vrot.slane %v237, 7
        %v240 = vrot.slane %v239, 2
        %v242 = vadd.f32 %v235, %v240
        %v243 = vstv %s220
        %v244 = vadd.f32 %v242, %v243
        %v245 = vmax.f32 %v244, 0.0
        %v246 = vmin.f32 %v245, 6.0
        %v247 = vmin.f32 %v233, %v246
        %v250 = vunpack.c.l.s4 1966171168
        %v251 = vunpack.c.0.s8 %v250
        %v252 = vlaneseq
        %v253 = vshrl.u32 %v252, 7
        %v254 = vsub.s32 %v251, %v253
        %v255 = vrot.slane %v247, %v254
        %v257 = vlaneseq
        %vm258 = vcmp.ge.s32.totalorder %v257, 0
        %vm259 = vcmp.lt.s32.totalorder %v257, 256
        %vm260 = vmand %vm258, %vm259
        %261 = vst.msk [vmem:[%s211] sm:$0x3] %vm260, %v255
        %s262 = sand.u32 %s98, 1
        %s263 = scalar_lea.sflag [#allocation4], %s262
        %s264 = sand.u32 %s98, 1
        %s265 = smul.addr %s264, 2
        %s266 = scalar_lea.vmem [#allocation9], %s265
        // Predicated region
        $region45: #{tpu_custom_call.1} parent=31 // pred_check
          %p267 = pneg %p108
        $region46: #{tpu_custom_call.1} parent=31 // pred_check_branch
          %269 = sbr.rel (%p267) target = $region48
        $region47: #{tpu_custom_call.1} parent=31 // pred_region
          %s270 = smul.u32 2, %s22
          %s272 = ssub.s32 32, 32
          %273 = vsyncadd %s263, %s272
          %s274 = smul.addr %s270, 16
          %s275 = scalar_lea.hbm %s3, %s274
          %s277 = sshll.u32 %s266, 4
          %s278 = int_to_ptr.vmem [resolvable:$true] %s277
          %280 = dma.vmem_to_hbm [thread:$0]  %s278, 32, %s275, %s263
        $region48: #{tpu_custom_call.1} parent=31 // pred_fallthru
          _
      $region32: #{tpu_custom_call.1} parent=5 // pred_fallthru
        _
      %p281 = scmp.le.s32.totalorder 2, %s17
      // Predicated region
      $region49: #{tpu_custom_call.1} parent=5 // pred_check
        %p282 = pneg %p281
      $region50: #{tpu_custom_call.1} parent=5 // pred_check_branch
        %284 = sbr.rel (%p282) target = $region52
      $region51: #{tpu_custom_call.1} parent=5 // pred_region
        %s285 = ssub.s32 %s17, 2
        // Predicated region
        $region53: #{tpu_custom_call.1} parent=51 // pred_check
          %p286 = pneg %p114
        $region54: #{tpu_custom_call.1} parent=51 // pred_check_branch
          %288 = sbr.rel (%p286) target = $region56
        $region55: #{tpu_custom_call.1} parent=51 // pred_region
          %s289 = sand.u32 %s99, 1
          %s290 = scalar_lea.sflag [#allocation4], %s289
          %s291 = sand.u32 %s99, 1
          %s292 = smul.addr %s291, 2
          %s293 = scalar_lea.vmem [#allocation9], %s292
          %294 = dma.done %s290, 32
        $region56: #{tpu_custom_call.1} parent=51 // pred_fallthru
          _
      $region52: #{tpu_custom_call.1} parent=5 // pred_fallthru
        _
    $region6: #{tpu_custom_call.1} parent=1 // loop_footer
      %s21 = sadd.s32 1, %s17
    $region7: #{tpu_custom_call.1} parent=1 // loop_footer_branch
      %16 = sbr.rel target = $region3
    $region8: #{tpu_custom_call.1} parent=1 // loop_exit
      _
    %295 = vsyncpa [#allocation3], 1
    %s296 = scalar_lea.sflag [#allocation3], 1
    %297 = vsyncpa %s296, 1
    %298 = vsyncpa [#allocation4], 1
    %s299 = scalar_lea.sflag [#allocation4], 1
    %300 = vsyncpa %s299, 1
    %301 = vsyncpa [#allocation5], 1
    %s302 = scalar_lea.sflag [#allocation5], 1
    %303 = vsyncpa %s302, 1
    %304 = vsyncpa [#allocation6], 1
    %s305 = scalar_lea.sflag [#allocation6], 1
    %306 = vsyncpa %s305, 1

</llo_original>
